<compile_context>
chip_gen: v5e
topology: v5e:2x2
jax: 0.10.0
libtpu: 0.0.40
codegen_flags: <defaults>
</compile_context>

<pallas_src>
import math

import jax
import jax.numpy as jnp
from jax.experimental import pallas as pl
from jax.experimental.pallas import tpu as pltpu

SAMPLES_PER_STRAND = 100
NUM_COEFF = 64
N_FFT = SAMPLES_PER_STRAND - 1        # 99
N_FREQ = N_FFT // 2 + 1               # 50 rfft bins
K_EXT = 72                            # 64 coeff + 3 root cols + 5 zero pad (sublane-aligned)
OUT_W = 3 * SAMPLES_PER_STRAND        # 300: interleaved (t, c) output columns


# --------------------------------------------------------------------------- #
# Kernel: single fused matmul  y = [coeff | root_xyz | 0] @ W_all + bias      #
# --------------------------------------------------------------------------- #
def _perm_pca_kernel(coeff_ref, w_ref, bias_ref, out_ref):
    # coeff_ref: VMEM (1, TN, 72)   gathered PCA coeffs + root xyz (+ zero pad)
    # w_ref    : VMEM (72, 300)     fused blend + irfft + pad + root-indicator
    # bias_ref : VMEM (1, 300)      fused mean-shape bias (irfft'd, t=0 col = 0)
    # out_ref  : VMEM (1, TN, 300)  strand positions, columns = t*3 + channel
    # TODO(synk): cast coeff/W to bf16 once tolerance verified (review item 12).
    out_ref[0] = jnp.dot(coeff_ref[0], w_ref[...],
                         preferred_element_type=jnp.float32) + bias_ref[...]


# --------------------------------------------------------------------------- #
# Wrapper-side parameter fusion / gather                                      #
# --------------------------------------------------------------------------- #
def _spherical_to_cartesian(roots):
    # TODO(synk): real HairRoots does a head-mesh uv->scalp lookup; head_mesh is
    # unavailable, so an analytic unit-sphere mapping (u->theta, v->phi, r) is used.
    theta = roots[..., 0:1] * (2.0 * math.pi)
    phi = roots[..., 1:2] * math.pi
    r = roots[..., 2:3]
    sin_phi = jnp.sin(phi)
    return jnp.concatenate([r * sin_phi * jnp.cos(theta),
                            r * sin_phi * jnp.sin(theta),
                            r * jnp.cos(phi)], axis=-1)


def _fused_decoder_weights(mean_shape, blend_shapes):
    """Fuse PCA blend + torch.fft.irfft(n=99, norm='ortho') + leading zero pad
    + per-strand root add into one (72, 300) matrix and a (1, 300) bias.
    Output columns are interleaved: col = t*3 + channel (PyTorch layout)."""
    k = jnp.arange(N_FREQ, dtype=jnp.float32)[:, None]
    t = jnp.arange(N_FFT, dtype=jnp.float32)[None, :]
    ang = 2.0 * jnp.pi * k * t / N_FFT
    inv_sqrt_n = 1.0 / jnp.sqrt(jnp.float32(N_FFT))
    w_cos = jnp.where(k == 0, 1.0, 2.0) * inv_sqrt_n * jnp.cos(ang)     # (50, 99)
    w_sin = jnp.where(k == 0, 0.0, -2.0) * inv_sqrt_n * jnp.sin(ang)    # (50, 99)

    hi = jax.lax.Precision.HIGHEST
    w_ch, b_ch = [], []
    for c in range(3):
        bs_r = blend_shapes[:, :, c].astype(jnp.float32)                # (64, 50)
        bs_i = blend_shapes[:, :, 3 + c].astype(jnp.float32)
        mu_r = mean_shape[None, :, c].astype(jnp.float32)               # (1, 50)
        mu_i = mean_shape[None, :, 3 + c].astype(jnp.float32)
        w_ch.append(jnp.dot(bs_r, w_cos, precision=hi)
                    + jnp.dot(bs_i, w_sin, precision=hi))               # (64, 99)
        b_ch.append(jnp.dot(mu_r, w_cos, precision=hi)
                    + jnp.dot(mu_i, w_sin, precision=hi))               # (1, 99)

    # interleave channels, zero-pad t=0, flatten -> column = t*3 + c
    w_coeff = jnp.stack(w_ch, axis=-1)                                  # (64, 99, 3)
    w_coeff = jnp.pad(w_coeff, ((0, 0), (1, 0), (0, 0))).reshape(NUM_COEFF, OUT_W)
    bias = jnp.stack(b_ch, axis=-1)                                     # (1, 99, 3)
    bias = jnp.pad(bias, ((0, 0), (1, 0), (0, 0))).reshape(1, OUT_W)

    # 3 indicator rows: row r contributes 1.0 to every column of channel r
    w_root = jnp.tile(jnp.eye(3, dtype=jnp.float32), (1, SAMPLES_PER_STRAND))  # (3, 300)
    w_pad = jnp.zeros((K_EXT - NUM_COEFF - 3, OUT_W), jnp.float32)
    w_all = jnp.concatenate([w_coeff, w_root, w_pad], axis=0)           # (72, 300)
    return w_all.astype(jnp.float32), bias.astype(jnp.float32)


def perm_pca_forward(roots, texture, mean_shape, blend_shapes, scalp_bounds):
    B, C, H, W = texture.shape
    N = roots.shape[1]
    assert C == NUM_COEFF and blend_shapes.shape == (NUM_COEFF, N_FREQ, 6)

    # --- HairRoots.rescale + grid_sample(mode='nearest', align_corners=True,
    #     padding_mode='zeros') as an XLA gather (review item 4) -------------
    u0, u1, v0, v1 = (float(b) for b in scalp_bounds)
    u = (roots[..., 0] - u0) / (u1 - u0)
    v = (roots[..., 1] - v0) / (v1 - v0)
    ix = jnp.round(u * (W - 1)).astype(jnp.int32)    # round-half-even == nearbyint
    iy = jnp.round(v * (H - 1)).astype(jnp.int32)
    valid = (ix >= 0) & (ix <= W - 1) & (iy >= 0) & (iy <= H - 1)
    flat = jnp.clip(iy, 0, H - 1) * W + jnp.clip(ix, 0, W - 1)          # (B, N)

    # gather straight from (B, C, H*W): no full-texture transpose (item 11)
    tex_flat = texture.reshape(B, C, H * W).astype(jnp.float32)
    gathered = jnp.take_along_axis(tex_flat, flat[:, None, :], axis=2)  # (B, C, N)
    coeff = jnp.transpose(gathered, (0, 2, 1))                          # (B, N, 64)
    coeff = coeff * valid[..., None].astype(jnp.float32)                # 'zeros' pad

    # --- fold root positions into 3 extra K columns (review item 7) ---------
    root_xyz = _spherical_to_cartesian(roots).astype(jnp.float32)       # (B, N, 3)
    coeff_ext = jnp.concatenate(
        [coeff, root_xyz,
         jnp.zeros((B, N, K_EXT - NUM_COEFF - 3), jnp.float32)], axis=-1)  # (B, N, 72)

    w_all, bias = _fused_decoder_weights(mean_shape, blend_shapes)

    # --- strand tiling (review items 5 & 6) ----------------------------------
    TN = min(N, 256)
    if B * (N // TN) < 2 and TN % 16 == 0:
        TN //= 2                      # keep both v7x TensorCores busy when B == 1
    assert N % TN == 0, "N must be a multiple of the strand tile"
    # TODO(synk): pad coeff_ext/roots (and slice the output) for N not a tile multiple.

    grid_spec = pltpu.PrefetchScalarGridSpec(
        num_scalar_prefetch=0,
        grid=(B, N // TN),
        in_specs=[
            pl.BlockSpec((1, TN, K_EXT), lambda b, n: (b, n, 0)),   # coeff + root
            pl.BlockSpec((K_EXT, OUT_W), lambda b, n: (0, 0)),      # fused W
            pl.BlockSpec((1, OUT_W), lambda b, n: (0, 0)),          # fused bias
        ],
        out_specs=pl.BlockSpec((1, TN, OUT_W), lambda b, n: (b, n, 0)),
    )

    out = pl.pallas_call(
        _perm_pca_kernel,
        grid_spec=grid_spec,
        out_shape=jax.ShapeDtypeStruct((B, N, OUT_W), jnp.float32),
        compiler_params=pltpu.CompilerParams(
            dimension_semantics=("parallel", "parallel")),
    )(coeff_ext, w_all, bias)

    # columns are already (t, c)-interleaved -> reshape only (no copy, no transpose)
    return out.reshape(B, N, SAMPLES_PER_STRAND, 3)


# --------------------------------------------------------------------------- #
# Pure-JAX reference (validation only)                                        #
# --------------------------------------------------------------------------- #
def _reference_forward(roots, texture, mean_shape, blend_shapes, scalp_bounds):
    B, C, H, W = texture.shape
    N = roots.shape[1]
    u0, u1, v0, v1 = scalp_bounds
    u = (roots[..., 0] - u0) / (u1 - u0)
    v = (roots[..., 1] - v0) / (v1 - v0)
    ix = jnp.round(u * (W - 1)).astype(jnp.int32)
    iy = jnp.round(v * (H - 1)).astype(jnp.int32)
    valid = (ix >= 0) & (ix <= W - 1) & (iy >= 0) & (iy <= H - 1)
    flat = jnp.clip(iy, 0, H - 1) * W + jnp.clip(ix, 0, W - 1)
    tex_rows = jnp.transpose(texture, (0, 2, 3, 1)).reshape(B, H * W, C)
    coeff = jnp.take_along_axis(tex_rows, flat[..., None], axis=1)
    coeff = coeff * valid[..., None].astype(coeff.dtype)                 # (B, N, 64)
    x = mean_shape[None, None] + jnp.einsum(
        'bnk,kfs->bnfs', coeff, blend_shapes, precision=jax.lax.Precision.HIGHEST)
    pos = jnp.fft.irfft(x[..., :3] + 1j * x[..., 3:], n=N_FFT, axis=-2, norm='ortho')
    pos = jnp.concatenate([jnp.zeros((B, N, 1, 3), pos.dtype), pos], axis=-2)
    root_xyz = _spherical_to_cartesian(roots)
    return pos + root_xyz[:, :, None, :]


if __name__ == "__main__":
    key = jax.random.PRNGKey(0)
    B, N, H, W = 2, 16, 8, 8
    C = NUM_COEFF
    scalp_bounds = (0.15, 0.85, 0.1, 0.9)

    k1, k2, k3, k4, k5 = jax.random.split(key, 5)
    uv = jax.random.uniform(k1, (B, N, 2), minval=0.2, maxval=0.8)
    radius = jax.random.uniform(k2, (B, N, 1), minval=0.9, maxval=1.1)
    roots = jnp.concatenate([uv, radius], axis=-1).astype(jnp.float32)        # (B, N, 3)
    texture = (jax.random.normal(k3, (B, C, H, W)) * 0.1).astype(jnp.float32)
    mean_shape = (jax.random.normal(k4, (N_FREQ, 6)) * 0.05).astype(jnp.float32)
    blend_shapes = (jax.random.normal(k5, (NUM_COEFF, N_FREQ, 6)) * 0.02).astype(jnp.float32)

    out = perm_pca_forward(roots, texture, mean_shape, blend_shapes, scalp_bounds)
    jax.block_until_ready(out)
    assert out.shape == (B, N, SAMPLES_PER_STRAND, 3) and out.dtype == jnp.float32

    ref = _reference_forward(roots, texture, mean_shape, blend_shapes, scalp_bounds)
    assert bool(jnp.allclose(out, ref, atol=5e-3, rtol=5e-3)), "kernel/reference mismatch"

    print("KERNEL_OK")
</pallas_src>

<mosaic_0001>
module attributes {stable_mosaic.version = 11 : i64} {
  func.func @_perm_pca_kernel(%arg0: i32, %arg1: i32, %arg2: memref<1x16x72xf32, #tpu.memory_space<vmem>>, %arg3: memref<72x300xf32, #tpu.memory_space<vmem>>, %arg4: memref<1x300xf32, #tpu.memory_space<vmem>>, %arg5: memref<1x16x300xf32, #tpu.memory_space<vmem>>) attributes {dimension_semantics = [#tpu.dimension_semantics<parallel>, #tpu.dimension_semantics<parallel>], iteration_bounds = array<i64: 2, 1>, scalar_prefetch = 0 : i64, scratch_operands = 0 : i64, tpu.core_type = #tpu.core_type<tc>, window_params = [{transform_indices = @transform_0, window_bounds = array<i64: 1, 16, 72>}, {pipeline_mode = #tpu.pipeline_mode<synchronous>, transform_indices = @transform_1, window_bounds = array<i64: 72, 300>}, {pipeline_mode = #tpu.pipeline_mode<synchronous>, transform_indices = @transform_2, window_bounds = array<i64: 1, 300>}, {transform_indices = @transform_3, window_bounds = array<i64: 1, 16, 300>}]} {
    %c0 = arith.constant 0 : index
    %c0_0 = arith.constant 0 : index
    %c0_1 = arith.constant 0 : index
    %0 = vector.load %arg2[%c0, %c0_0, %c0_1] : memref<1x16x72xf32, #tpu.memory_space<vmem>>, vector<1x16x72xf32>
    %1 = vector.shape_cast %0 : vector<1x16x72xf32> to vector<16x72xf32>
    %c0_2 = arith.constant 0 : index
    %c0_3 = arith.constant 0 : index
    %2 = vector.load %arg3[%c0_2, %c0_3] : memref<72x300xf32, #tpu.memory_space<vmem>>, vector<72x300xf32>
    %cst = arith.constant dense<0.000000e+00> : vector<16x300xf32>
    %3 = tpu.matmul %1, %2, %cst {dimension_numbers = #tpu.dot_dimension_numbers<[1], [0], [0], [1], [0, 0, 1, 1], [], []>} : vector<16x72xf32>, vector<72x300xf32>, vector<16x300xf32> -> vector<16x300xf32>
    %c0_4 = arith.constant 0 : index
    %c0_5 = arith.constant 0 : index
    %4 = vector.load %arg4[%c0_4, %c0_5] : memref<1x300xf32, #tpu.memory_space<vmem>>, vector<1x300xf32>
    %5 = vector.broadcast %4 : vector<1x300xf32> to vector<16x300xf32>
    %6 = arith.addf %3, %5 : vector<16x300xf32>
    %c0_6 = arith.constant 0 : index
    %c0_7 = arith.constant 0 : index
    %c0_8 = arith.constant 0 : index
    %7 = vector.load %arg5[%c0_6, %c0_7, %c0_8] : memref<1x16x300xf32, #tpu.memory_space<vmem>>, vector<1x16x300xf32>
    %8 = vector.shape_cast %7 : vector<1x16x300xf32> to vector<16x300xf32>
    %9 = vector.shape_cast %6 : vector<16x300xf32> to vector<1x16x300xf32>
    tpu.vector_store %arg5[%c0_6, %c0_7, %c0_8], %9 {strides = array<i32>} : memref<1x16x300xf32, #tpu.memory_space<vmem>>, vector<1x16x300xf32>,
    return
  }
  func.func @transform_0(%arg0: i32, %arg1: i32) -> (i32, i32, i32) {
    %c0_i32 = arith.constant 0 : i32
    %c0_i32_0 = arith.constant 0 : i32
    return %arg0, %arg1, %c0_i32 : i32, i32, i32
  }
  func.func @transform_1(%arg0: i32, %arg1: i32) -> (i32, i32) {
    %c0_i32 = arith.constant 0 : i32
    %c0_i32_0 = arith.constant 0 : i32
    %c0_i32_1 = arith.constant 0 : i32
    return %c0_i32, %c0_i32_0 : i32, i32
  }
  func.func @transform_2(%arg0: i32, %arg1: i32) -> (i32, i32) {
    %c0_i32 = arith.constant 0 : i32
    %c0_i32_0 = arith.constant 0 : i32
    %c0_i32_1 = arith.constant 0 : i32
    return %c0_i32, %c0_i32_0 : i32, i32
  }
  func.func @transform_3(%arg0: i32, %arg1: i32) -> (i32, i32, i32) {
    %c0_i32 = arith.constant 0 : i32
    %c0_i32_0 = arith.constant 0 : i32
    return %arg0, %arg1, %c0_i32 : i32, i32, i32
  }
}

</mosaic_0001>

<llo_original>
// kernel: tpu_custom_call.1
$region0: #{tpu_custom_call.1}
  #allocation0 [shape = 'u32[]', space=smem, size = 0x4, offset = 0x4, fixed_abs, tag = 'smem constant byte address 0x4 - core index']
  #allocation1 [shape = 'u32[72,128]{1,0:T(1,128)}', space=vmem, size = 0x9000, scoped, tag = 'internal scratch']
  %s0 = inlined_call_operand.hbm [shape: f32[2,16,72], index: 0, kind: input, shape index: {}]
  %s1 = inlined_call_operand.hbm [shape: f32[72,300], index: 1, kind: input, shape index: {}]
  %s2 = inlined_call_operand.hbm [shape: f32[1,300], index: 2, kind: input, shape index: {}]
  %s3 = inlined_call_operand.hbm [shape: f32[2,16,300], index: 3, kind: output, shape index: {}]
  %s4 = sld [smem:[#allocation0]]
  $region57: #{tpu_custom_call.1} parent=0
    _
  %s6 = ssub.s32 1, %s4
  %s7 = scalar_select 0, %s6, %s4
  $region1: #{tpu_custom_call.1} parent=0
    #allocation2 [shape = 'u8[16384]{0}', space=vmem, size = 0x4000, scoped, tag = 'input window, operand 0']
    #allocation3 [shape = 's32[2]{0}', space=sflag, size = 0x8, scoped, tag = 'scoped memory for tpu_custom_call.1']
    #allocation4 [shape = 's32[2]{0}', space=sflag, size = 0x8, scoped, tag = 'scoped memory for tpu_custom_call.1']
    #allocation5 [shape = 'u8[110592]{0}', space=vmem, size = 0x1b000, scoped, tag = 'input window, operand 1, single buffered']
    #allocation6 [shape = 's32[1]{0}', space=sflag, size = 0x4, scoped, tag = 'scoped memory for tpu_custom_call.1']
    #allocation7 [shape = 'u8[1536]{0}', space=vmem, size = 0x800, scoped, tag = 'input window, operand 2, single buffered']
    #allocation8 [shape = 'u8[49152]{0}', space=vmem, size = 0xc000, scoped, tag = 'output window, operand 0']
    %8 = vsyncpa [#allocation3], 0
    %s9 = scalar_lea.sflag [#allocation3], 1
    %10 = vsyncpa %s9, 0
    %11 = vsyncpa [#allocation6], 0
    %12 = vsyncpa [#allocation4], 0
    %s13 = scalar_lea.sflag [#allocation4], 1
    %14 = vsyncpa %s13, 0
    loop: start=0, step=1, limit=4
    $region2: #{tpu_custom_call.1} parent=1 // loop_pre_header
      _
    $region3: #{tpu_custom_call.1} parent=1 // loop_header
      %s16 = sphi 0, %s20
      %p17 = scmp.ge.s32.totalorder %s16, 4
      %s23 = sphi 0, %s35
      %s24 = sphi 0, %s31
      %s25 = sphi 0, %s23
      %s26 = sphi 0, %s24
      %s27 = sphi 0, %s25
      %s28 = sphi 0, %s26
      %s40 = sphi 0, %s42
      %s43 = sphi 0, %s40
      %s44 = sphi 0, %s43
      %s60 = sphi 0, %s44
      %s64 = sphi 0, %s64
      %s66 = sphi 0, %s64
      %s67 = sphi 0, %s66
      %s81 = sphi 0, %s67
      %s85 = sphi 0, %s85
      %s87 = sphi 0, %s85
      %s88 = sphi 0, %s87
      %s102 = sphi 0, %s88
      %s110 = sphi 0, %s112
      %s113 = sphi 0, %s110
      %s114 = sphi 0, %s113
      %s130 = sphi 0, %s114
    $region4: #{tpu_custom_call.1} parent=1 // loop_header_branch
      %19 = sbr.rel (%p17) target = $region8
    $region5: #{tpu_custom_call.1} parent=1 // loop_body
      %s21 = ssub.s32 %s16, 1
      %s22 = ssub.s32 %s16, 2
      %s29 = sadd.s32 1, %s24
      %p30 = scmp.ge.s32.totalorder %s29, 1
      %s31 = scalar_select %p30, 0, %s29
      %s32 = sadd.s32 1, %s23
      %s33 = scalar_select %p30, %s32, %s23
      %p34 = scmp.ge.s32.totalorder %s33, 2
      %s35 = scalar_select %p34, 0, %s33
      %s36 = ssub.s32 %s23, %s35
      %s37 = ssub.s32 %s24, %s31
      %s38 = sor.u32 %s36, %s37
      %p39 = scmp.eq.s32.totalorder %s38, 0
      %s41 = sadd.s32 %s40, 1
      %s42 = scalar_select %p39, %s40, %s41
      %p45 = pneg %p39
      %p46 = scmp.eq.s32.totalorder %s16, 1
      %p47 = por %p45, %p46
      %p48 = scmp.ne.s32.totalorder %s40, %s43
      %p49 = scmp.eq.s32.totalorder %s16, 0
      %p50 = por %p48, %p49
      %p51 = scmp.ne.s32.totalorder %s40, %s43
      %p52 = scmp.eq.s32.totalorder %s21, 1
      %p53 = por %p51, %p52
      %p54 = scmp.ne.s32.totalorder %s43, %s44
      %p55 = scmp.eq.s32.totalorder %s21, 0
      %p56 = por %p54, %p55
      %p57 = scmp.ne.s32.totalorder %s43, %s44
      %p58 = scmp.eq.s32.totalorder %s22, 1
      %p59 = por %p57, %p58
      %p61 = scmp.ne.s32.totalorder %s44, %s60
      %p62 = scmp.eq.s32.totalorder %s22, 0
      %p63 = por %p61, %p62
      %s65 = sadd.s32 %s64, 1
      %p68 = scmp.eq.s32.totalorder %s16, 1
      %p69 = scmp.ne.s32.totalorder %s64, %s66
      %p70 = scmp.eq.s32.totalorder %s16, 0
      %p71 = por %p69, %p70
      %p72 = scmp.ne.s32.totalorder %s64, %s66
      %p73 = scmp.eq.s32.totalorder %s21, 1
      %p74 = por %p72, %p73
      %p75 = scmp.ne.s32.totalorder %s66, %s67
      %p76 = scmp.eq.s32.totalorder %s21, 0
      %p77 = por %p75, %p76
      %p78 = scmp.ne.s32.totalorder %s66, %s67
      %p79 = scmp.eq.s32.totalorder %s22, 1
      %p80 = por %p78, %p79
      %p82 = scmp.ne.s32.totalorder %s67, %s81
      %p83 = scmp.eq.s32.totalorder %s22, 0
      %p84 = por %p82, %p83
      %s86 = sadd.s32 %s85, 1
      %p89 = scmp.eq.s32.totalorder %s16, 1
      %p90 = scmp.ne.s32.totalorder %s85, %s87
      %p91 = scmp.eq.s32.totalorder %s16, 0
      %p92 = por %p90, %p91
      %p93 = scmp.ne.s32.totalorder %s85, %s87
      %p94 = scmp.eq.s32.totalorder %s21, 1
      %p95 = por %p93, %p94
      %p96 = scmp.ne.s32.totalorder %s87, %s88
      %p97 = scmp.eq.s32.totalorder %s21, 0
      %p98 = por %p96, %p97
      %p99 = scmp.ne.s32.totalorder %s87, %s88
      %p100 = scmp.eq.s32.totalorder %s22, 1
      %p101 = por %p99, %p100
      %p103 = scmp.ne.s32.totalorder %s88, %s102
      %p104 = scmp.eq.s32.totalorder %s22, 0
      %p105 = por %p103, %p104
      %s106 = ssub.s32 %s23, %s35
      %s107 = ssub.s32 %s24, %s31
      %s108 = sor.u32 %s106, %s107
      %p109 = scmp.eq.s32.totalorder %s108, 0
      %s111 = sadd.s32 %s110, 1
      %s112 = scalar_select %p109, %s110, %s111
      %p115 = pneg %p109
      %p116 = scmp.eq.s32.totalorder %s16, 1
      %p117 = por %p115, %p116
      %p118 = scmp.ne.s32.totalorder %s110, %s113
      %p119 = scmp.eq.s32.totalorder %s16, 0
      %p120 = por %p118, %p119
      %p121 = scmp.ne.s32.totalorder %s110, %s113
      %p122 = scmp.eq.s32.totalorder %s21, 1
      %p123 = por %p121, %p122
      %p124 = scmp.ne.s32.totalorder %s113, %s114
      %p125 = scmp.eq.s32.totalorder %s21, 0
      %p126 = por %p124, %p125
      %p127 = scmp.ne.s32.totalorder %s113, %s114
      %p128 = scmp.eq.s32.totalorder %s22, 1
      %p129 = por %p127, %p128
      %p131 = scmp.ne.s32.totalorder %s114, %s130
      %p132 = scmp.eq.s32.totalorder %s22, 0
      %p133 = por %p131, %p132
      %p134 = scmp.le.s32.totalorder 1, %s16
      %p135 = scmp.lt.s32.totalorder %s16, 3
      %p136 = pnand %p134, %p135
      %p137 = pneg %p136
      // Predicated region
      $region9: #{tpu_custom_call.1} parent=5 // pred_check
        _
      $region10: #{tpu_custom_call.1} parent=5 // pred_check_branch
        %139 = sbr.rel (%p136) target = $region12
      $region11: #{tpu_custom_call.1} parent=5 // pred_region
        %s140 = ssub.s32 %s16, 1
        // Predicated region
        $region13: #{tpu_custom_call.1} parent=11 // pred_check
          %p141 = pneg %p77
        $region14: #{tpu_custom_call.1} parent=11 // pred_check_branch
          %143 = sbr.rel (%p141) target = $region16
        $region15: #{tpu_custom_call.1} parent=11 // pred_region
          %145 = vsyncadd [#allocation6], 0
          %s146 = sshll.u32 %s1, 4
          %s147 = int_to_ptr.hbm [resolvable:$true] %s146
          %s148 = sshll.u32 [#allocation5], 4
          %s149 = int_to_ptr.vmem [resolvable:$true] %s148
          %154 = dma.hbm_to_vmem [thread:$0]  %s147, 3456, %s149, [#allocation6], 384, 384, 24
        $region16: #{tpu_custom_call.1} parent=11 // pred_fallthru
          _
        // Predicated region
        $region17: #{tpu_custom_call.1} parent=11 // pred_check
          %p155 = pneg %p98
        $region18: #{tpu_custom_call.1} parent=11 // pred_check_branch
          %157 = sbr.rel (%p155) target = $region20
        $region19: #{tpu_custom_call.1} parent=11 // pred_region
          %159 = vsyncadd [#allocation6], 0
          %s161 = sshll.u32 %s2, 4
          %s162 = int_to_ptr.hbm [resolvable:$true] %s161
          %s163 = sshll.u32 [#allocation7], 4
          %s164 = int_to_ptr.vmem [resolvable:$true] %s163
          %166 = dma.hbm_to_vmem [thread:$0]  %s162, 48, %s164, [#allocation6]
        $region20: #{tpu_custom_call.1} parent=11 // pred_fallthru
          _
      $region12: #{tpu_custom_call.1} parent=5 // pred_fallthru
        _
      %p167 = scmp.lt.s32.totalorder %s16, 2
      // Predicated region
      $region21: #{tpu_custom_call.1} parent=5 // pred_check
        %p168 = pneg %p167
      $region22: #{tpu_custom_call.1} parent=5 // pred_check_branch
        %170 = sbr.rel (%p168) target = $region24
      $region23: #{tpu_custom_call.1} parent=5 // pred_region
        // Predicated region
        $region25: #{tpu_custom_call.1} parent=23 // pred_check
          %p171 = pneg %p50
        $region26: #{tpu_custom_call.1} parent=23 // pred_check_branch
          %173 = sbr.rel (%p171) target = $region28
        $region27: #{tpu_custom_call.1} parent=23 // pred_region
          %s174 = sand.u32 %s40, 1
          %s175 = scalar_lea.sflag [#allocation3], %s174
          %s176 = sand.u32 %s40, 1
          %s177 = smul.addr %s176, 16
          %s178 = scalar_lea.vmem [#allocation2], %s177
          %s179 = smul.u32 2, %s24
          %181 = vsyncadd %s175, 0
          %s182 = smul.addr %s23, 2
          %s183 = sadd.s32 %s179, %s182
          %s184 = smul.addr %s183, 8
          %s185 = scalar_lea.hbm %s0, %s184
          %s186 = sshll.u32 %s185, 4
          %s187 = int_to_ptr.hbm [resolvable:$true] %s186
          %s188 = sshll.u32 %s178, 4
          %s189 = int_to_ptr.vmem [resolvable:$true] %s188
          %194 = dma.hbm_to_vmem [thread:$0]  %s187, 256, %s189, %s175, 128, 128, 8
        $region28: #{tpu_custom_call.1} parent=23 // pred_fallthru
          _
      $region24: #{tpu_custom_call.1} parent=5 // pred_fallthru
        _
      %p195 = scmp.le.s32.totalorder 1, %s16
      %p196 = scmp.lt.s32.totalorder %s16, 3
      %p197 = pnand %p195, %p196
      %p198 = pneg %p197
      // Predicated region
      $region29: #{tpu_custom_call.1} parent=5 // pred_check
        _
      $region30: #{tpu_custom_call.1} parent=5 // pred_check_branch
        %200 = sbr.rel (%p197) target = $region32
      $region31: #{tpu_custom_call.1} parent=5 // pred_region
        %s201 = ssub.s32 %s16, 1
        %s202 = sand.u32 %s43, 1
        %s203 = scalar_lea.sflag [#allocation3], %s202
        %s204 = sand.u32 %s43, 1
        %s205 = smul.addr %s204, 16
        %s206 = scalar_lea.vmem [#allocation2], %s205
        // Predicated region
        $region33: #{tpu_custom_call.1} parent=31 // pred_check
          %p207 = pneg %p56
        $region34: #{tpu_custom_call.1} parent=31 // pred_check_branch
          %209 = sbr.rel (%p207) target = $region36
        $region35: #{tpu_custom_call.1} parent=31 // pred_region
          %211 = dma.done %s203, 256
        $region36: #{tpu_custom_call.1} parent=31 // pred_fallthru
          _
        // Predicated region
        $region37: #{tpu_custom_call.1} parent=31 // pred_check
          %p212 = pneg %p77
        $region38: #{tpu_custom_call.1} parent=31 // pred_check_branch
          %214 = sbr.rel (%p212) target = $region40
        $region39: #{tpu_custom_call.1} parent=31 // pred_region
          %216 = dma.done [#allocation6], 3456
        $region40: #{tpu_custom_call.1} parent=31 // pred_fallthru
          _
        // Predicated region
        $region41: #{tpu_custom_call.1} parent=31 // pred_check
          %p217 = pneg %p98
        $region42: #{tpu_custom_call.1} parent=31 // pred_check_branch
          %219 = sbr.rel (%p217) target = $region44
        $region43: #{tpu_custom_call.1} parent=31 // pred_region
          %221 = dma.done [#allocation6], 48
        $region44: #{tpu_custom_call.1} parent=31 // pred_fallthru
          _
        %s222 = sand.u32 %s43, 1
        %s223 = scalar_lea.sflag [#allocation3], %s222
        %s224 = sand.u32 %s43, 1
        %s225 = smul.addr %s224, 16
        %s226 = scalar_lea.vmem [#allocation2], %s225
        %p227 = pneg %p56
        %p228 = pneg %p53
        %p229 = pneg %p77
        %p230 = pneg %p74
        %p231 = pneg %p98
        %p232 = pneg %p95
        %p233 = pneg %p126
        %p234 = pneg %p123
        %s235 = sand.u32 %s113, 1
        %s236 = scalar_lea.sflag [#allocation4], %s235
        %s237 = sand.u32 %s113, 1
        %s238 = smul.addr %s237, 48
        %s239 = scalar_lea.vmem [#allocation8], %s238
        %s240 = smul.u32 2, %s26
        %s241 = smul.u32 2, %s26
        %v242 = vld [vmem:[%s206] sm:$0xff]
        %v243 = vld [vmem:[%s206 + $0x8] sm:$0xff]
        %v244 = vld [vmem:[#allocation5] sm:$0xff]
        %v245 = vld [vmem:[#allocation5 + $0x8] sm:$0xff]
        %v246 = vld [vmem:[#allocation5 + $0x10] sm:$0xff]
        %v247 = vld [vmem:[#allocation5 + $0x18] sm:$0xff]
        %v248 = vld [vmem:[#allocation5 + $0x20] sm:$0xff]
        %v249 = vld [vmem:[#allocation5 + $0x28] sm:$0xff]
        %v250 = vld [vmem:[#allocation5 + $0x30] sm:$0xff]
        %v251 = vld [vmem:[#allocation5 + $0x38] sm:$0xff]
        %v252 = vld [vmem:[#allocation5 + $0x40] sm:$0xff]
        %v253 = vld [vmem:[#allocation5 + $0x48] sm:$0xff]
        %v254 = vld [vmem:[#allocation5 + $0x50] sm:$0xff]
        %v255 = vld [vmem:[#allocation5 + $0x58] sm:$0xff]
        %v256 = vld [vmem:[#allocation5 + $0x60] sm:$0xff]
        %v257 = vld [vmem:[#allocation5 + $0x68] sm:$0xff]
        %v258 = vld [vmem:[#allocation5 + $0x70] sm:$0xff]
        %v259 = vld [vmem:[#allocation5 + $0x78] sm:$0xff]
        %v260 = vld [vmem:[#allocation5 + $0x80] sm:$0xff]
        %v261 = vld [vmem:[#allocation5 + $0x88] sm:$0xff]
        %v262 = vld [vmem:[#allocation5 + $0x90] sm:$0xff]
        %v263 = vld [vmem:[#allocation5 + $0x98] sm:$0xff]
        %v264 = vld [vmem:[#allocation5 + $0xa0] sm:$0xff]
        %v265 = vld [vmem:[#allocation5 + $0xa8] sm:$0xff]
        %v266 = vld [vmem:[#allocation5 + $0xb0] sm:$0xff]
        %v267 = vld [vmem:[#allocation5 + $0xb8] sm:$0xff]
        %v268 = vld [vmem:[#allocation5 + $0xc0] sm:$0xff]
        %v269 = vld [vmem:[#allocation5 + $0xc8] sm:$0xff]
        %v270 = vld [vmem:[#allocation5 + $0xd0] sm:$0xff]
        %v271 = vld [vmem:[#allocation7] sm:$0x7]
        %v273 = vperm.slane %v271, 0
        %v274 = vperm.slane %v271, 1
        %v275 = vperm.slane %v271, 2
        %vm279 = vcmask 588800
        %v281 = vsel %vm279, %v242, 0
        %v284 = vsel %vm279, %v243, 0
        %286 = vmatpush.msra.mxu0 0.0
        %287 = vmatpush.msra.mxu0 0.0
        %288 = vmatpush.msra.mxu0 0.0
        %289 = vmatpush.msra.mxu0 0.0
        %290 = vmatpush.msra.mxu0 0.0
        %291 = vmatpush.msra.mxu0 0.0
        %292 = vmatpush.msra.mxu0 0.0
        %293 = vmatpush.msra.mxu0 %v268
        %294 = vmatpush.msra.mxu0 %v265
        %295 = vmatpush.msra.mxu0 %v262
        %296 = vmatpush.msra.mxu0 %v259
        %297 = vmatpush.msra.mxu0 %v256
        %298 = vmatpush.msra.mxu0 %v253
        %299 = vmatpush.msra.mxu0 %v250
        %300 = vmatpush.msra.mxu0 %v247
        %301 = vmatpush.msra.mxu0 %v244
        %302 = vmatmul.f32.gmra.mxu0 %v281
        %v303 = vpop.f32.mrf.mxu0
        %v304 = vadd.f32 %v273, %v303
        %305 = vmatmul.f32.gmra.mxu0 %v284
        %v306 = vpop.f32.mrf.mxu0
        %v307 = vadd.f32 %v273, %v306
        %308 = vdwg.mxu0
        %309 = vmatpush.msra.mxu0 0.0
        %310 = vmatpush.msra.mxu0 0.0
        %311 = vmatpush.msra.mxu0 0.0
        %312 = vmatpush.msra.mxu0 0.0
        %313 = vmatpush.msra.mxu0 0.0
        %314 = vmatpush.msra.mxu0 0.0
        %315 = vmatpush.msra.mxu0 0.0
        %316 = vmatpush.msra.mxu0 %v269
        %317 = vmatpush.msra.mxu0 %v266
        %318 = vmatpush.msra.mxu0 %v263
        %319 = vmatpush.msra.mxu0 %v260
        %320 = vmatpush.msra.mxu0 %v257
        %321 = vmatpush.msra.mxu0 %v254
        %322 = vmatpush.msra.mxu0 %v251
        %323 = vmatpush.msra.mxu0 %v248
        %324 = vmatpush.msra.mxu0 %v245
        %325 = vmatmul.f32.gmra.mxu0 %v281
        %v326 = vpop.f32.mrf.mxu0
        %v327 = vadd.f32 %v274, %v326
        %328 = vmatmul.f32.gmra.mxu0 %v284
        %v329 = vpop.f32.mrf.mxu0
        %v330 = vadd.f32 %v274, %v329
        %331 = vdwg.mxu0
        %332 = vmatpush.msra.mxu0 0.0
        %333 = vmatpush.msra.mxu0 0.0
        %334 = vmatpush.msra.mxu0 0.0
        %335 = vmatpush.msra.mxu0 0.0
        %336 = vmatpush.msra.mxu0 0.0
        %337 = vmatpush.msra.mxu0 0.0
        %338 = vmatpush.msra.mxu0 0.0
        %339 = vmatpush.msra.mxu0 %v270
        %340 = vmatpush.msra.mxu0 %v267
        %341 = vmatpush.msra.mxu0 %v264
        %342 = vmatpush.msra.mxu0 %v261
        %343 = vmatpush.msra.mxu0 %v258
        %344 = vmatpush.msra.mxu0 %v255
        %345 = vmatpush.msra.mxu0 %v252
        %346 = vmatpush.msra.mxu0 %v249
        %347 = vmatpush.msra.mxu0 %v246
        %348 = vmatmul.f32.gmra.mxu0 %v281
        %v349 = vpop.f32.mrf.mxu0
        %v350 = vadd.f32 %v275, %v349
        %351 = vmatmul.f32.gmra.mxu0 %v284
        %v352 = vpop.f32.mrf.mxu0
        %v353 = vadd.f32 %v275, %v352
        %354 = vdwg.mxu0
        %355 = vst [vmem:[%s239] sm:$0xff] %v304
        %356 = vst [vmem:[%s239 + $0x8] sm:$0xff] %v327
        %vm357 = vcmask 359424
        %358 = vst.msk [vmem:[%s239 + $0x10] sm:$0xff] %vm357, %v350
        %359 = vst [vmem:[%s239 + $0x18] sm:$0xff] %v307
        %360 = vst [vmem:[%s239 + $0x20] sm:$0xff] %v330
        %361 = vst.msk [vmem:[%s239 + $0x28] sm:$0xff] %vm357, %v353
        %s362 = sand.u32 %s113, 1
        %s363 = scalar_lea.sflag [#allocation4], %s362
        %s364 = sand.u32 %s113, 1
        %s365 = smul.addr %s364, 48
        %s366 = scalar_lea.vmem [#allocation8], %s365
        // Predicated region
        $region45: #{tpu_custom_call.1} parent=31 // pred_check
          %p367 = pneg %p123
        $region46: #{tpu_custom_call.1} parent=31 // pred_check_branch
          %369 = sbr.rel (%p367) target = $region48
        $region47: #{tpu_custom_call.1} parent=31 // pred_region
          %s370 = smul.u32 2, %s26
          %372 = vsyncadd %s363, 0
          %s373 = smul.addr %s370, 3
          %s374 = smul.addr %s25, 6
          %s375 = sadd.s32 %s373, %s374
          %s376 = smul.addr %s375, 8
          %s377 = scalar_lea.hbm %s3, %s376
          %s378 = sshll.u32 %s366, 4
          %s379 = int_to_ptr.vmem [resolvable:$true] %s378
          %s380 = sshll.u32 %s377, 4
          %s381 = int_to_ptr.hbm [resolvable:$true] %s380
          %386 = dma.vmem_to_hbm [thread:$0]  %s379, 768, %s381, %s363, 384, 384, 24
        $region48: #{tpu_custom_call.1} parent=31 // pred_fallthru
          _
      $region32: #{tpu_custom_call.1} parent=5 // pred_fallthru
        _
      %p387 = scmp.le.s32.totalorder 2, %s16
      // Predicated region
      $region49: #{tpu_custom_call.1} parent=5 // pred_check
        %p388 = pneg %p387
      $region50: #{tpu_custom_call.1} parent=5 // pred_check_branch
        %390 = sbr.rel (%p388) target = $region52
      $region51: #{tpu_custom_call.1} parent=5 // pred_region
        %s391 = ssub.s32 %s16, 2
        // Predicated region
        $region53: #{tpu_custom_call.1} parent=51 // pred_check
          %p392 = pneg %p129
        $region54: #{tpu_custom_call.1} parent=51 // pred_check_branch
          %394 = sbr.rel (%p392) target = $region56
        $region55: #{tpu_custom_call.1} parent=51 // pred_region
          %s395 = sand.u32 %s114, 1
          %s396 = scalar_lea.sflag [#allocation4], %s395
          %s397 = sand.u32 %s114, 1
          %s398 = smul.addr %s397, 48
          %s399 = scalar_lea.vmem [#allocation8], %s398
          %401 = dma.done %s396, 768
        $region56: #{tpu_custom_call.1} parent=51 // pred_fallthru
          _
      $region52: #{tpu_custom_call.1} parent=5 // pred_fallthru
        _
    $region6: #{tpu_custom_call.1} parent=1 // loop_footer
      %s20 = sadd.s32 1, %s16
    $region7: #{tpu_custom_call.1} parent=1 // loop_footer_branch
      %15 = sbr.rel target = $region3
    $region8: #{tpu_custom_call.1} parent=1 // loop_exit
      _
    %402 = vsyncpa [#allocation3], 1
    %s403 = scalar_lea.sflag [#allocation3], 1
    %404 = vsyncpa %s403, 1
    %405 = vsyncpa [#allocation6], 1
    %406 = vsyncpa [#allocation4], 1
    %s407 = scalar_lea.sflag [#allocation4], 1
    %408 = vsyncpa %s407, 1

</llo_original>
